<compile_context>
chip_gen: v7x
topology: tpu7x:2x2x1
jax: 0.10.0
libtpu: 0.0.40
codegen_flags: <defaults>
</compile_context>

<pallas_src>
import functools

import jax
import jax.numpy as jnp
from jax import lax
from jax.experimental import pallas as pl
from jax.experimental.pallas import tpu as pltpu


# ---------------------------------------------------------------------------
# Path 1: large-vocab tables -- per-row DMA gather straight into the out tile.
# ---------------------------------------------------------------------------
def _embedding_gather_kernel(ids_ref, wte_hbm, out_ref, sem, *, tm, unroll):
    # ids_ref : SMEM [tm] int32   (streamed per tile, O(tm) SMEM footprint)
    # wte_hbm : HBM  [V, E]       (memory_space=pl.ANY, manual DMA)
    # out_ref : VMEM [tm, E]      output tile for this grid step
    # sem     : single shared DMA semaphore

    def issue(j, carry):
        row = ids_ref[j]                       # scalar id read from SMEM
        pltpu.make_async_copy(
            wte_hbm.at[pl.ds(row, 1), :],      # one embedding row in HBM
            out_ref.at[pl.ds(j, 1), :],        # row j of the output VMEM tile
            sem,                               # all copies share one semaphore
        ).start()
        return carry

    # Issue all `tm` row gathers first so they are all in flight concurrently.
    lax.fori_loop(0, tm, issue, 0, unroll=unroll)

    # Drain: reconstruct a same-shaped descriptor per row and wait on the
    # shared semaphore (paged-attention pattern).  Keeps semaphore scratch at
    # O(1) so tm can scale to 128-256.
    def drain(j, carry):
        pltpu.make_async_copy(
            wte_hbm.at[pl.ds(0, 1), :],
            out_ref.at[pl.ds(j, 1), :],
            sem,
        ).wait()
        return carry

    lax.fori_loop(0, tm, drain, 0, unroll=unroll)


# ---------------------------------------------------------------------------
# Path 2: small tables -- table resident in VMEM, gather = one-hot @ wte (MXU).
# ---------------------------------------------------------------------------
def _embedding_onehot_kernel(ids_ref, wte_ref, out_ref):
    # ids_ref : VMEM [tm, 1] int32
    # wte_ref : VMEM [V, E]  full table, resident across the grid
    # out_ref : VMEM [tm, E]
    tm = out_ref.shape[0]
    v = wte_ref.shape[0]
    ids = ids_ref[...]                                       # [tm, 1]
    cols = lax.broadcasted_iota(jnp.int32, (tm, v), 1)       # [tm, V]
    onehot = (cols == ids).astype(wte_ref.dtype)             # one 1.0 per row
    out_ref[...] = jnp.dot(
        onehot, wte_ref[...], preferred_element_type=jnp.float32
    ).astype(out_ref.dtype)


def _pick_tile(m, tm_max):
    """Largest legal token tile; avoids padding (and the out[:M] copy) when possible."""
    tm_max = max(8, min(int(tm_max), m))
    if m <= tm_max:
        return m, m                       # single full tile (block dim == array dim)
    tm_max -= tm_max % 8                  # keep the sublane (8) block constraint
    # Prefer a tile that divides M exactly (no padding), but don't shrink below
    # half the requested tile just to avoid a small pad.
    for t in range(tm_max, max(7, tm_max // 2 - 1), -8):
        if m % t == 0:
            return t, m
    return tm_max, pl.cdiv(m, tm_max) * tm_max   # rare: pad, slice off below


@functools.partial(
    jax.jit, static_argnames=("tm", "small_table_bytes", "use_vmem_table")
)
def embedding_pallas(input_ids, wte, *, tm=128, small_table_bytes=4 << 20,
                     use_vmem_table=None):
    """Token embedding lookup.

    input_ids: [..., S] integer ids
    wte      : [V, E] embedding table
    returns  : [prod(leading), S, E]  (matches the PyTorch module's view(-1, S))
    """
    in_shape = input_ids.shape
    S = in_shape[-1]
    V, E = wte.shape
    itemsize = jnp.dtype(wte.dtype).itemsize

    ids2d = input_ids.reshape(-1, S).astype(jnp.int32)
    lead = ids2d.shape[0]
    ids_flat = ids2d.reshape(-1)
    M = ids_flat.shape[0]

    if use_vmem_table is None:
        use_vmem_table = (V <= 4096) and (V * E * itemsize <= small_table_bytes)

    # Cap tm so the double-buffered [tm, E] output tile (+ headroom) stays well
    # under v7x's 64 MiB physical VMEM; v5e/v6e have more, so this is safe there.
    vmem_budget = 24 << 20
    tm_cap = max(8, vmem_budget // (4 * E * itemsize))
    tm_eff, m_pad = _pick_tile(M, min(int(tm), tm_cap))

    if m_pad != M:
        # Padded ids gather row 0 and are sliced off below (rare path).
        ids_flat = jnp.pad(ids_flat, (0, m_pad - M))
    n_tiles = m_pad // tm_eff

    if use_vmem_table:
        vmem_needed = (2 * V * E * itemsize + 2 * tm_eff * E * itemsize
                       + tm_eff * V * 4 + (1 << 20))
    else:
        vmem_needed = 2 * tm_eff * E * itemsize + (1 << 20)
    vmem_limit = int(vmem_needed + (4 << 20)) if vmem_needed > (16 << 20) else None

    compiler_params = pltpu.CompilerParams(
        dimension_semantics=("parallel",),   # shard token tiles over v7x's 2 TCs
        vmem_limit_bytes=vmem_limit,
    )

    if use_vmem_table:
        # Small-table fast path: table resident in VMEM, one-hot gather on MXU.
        ids_col = ids_flat.reshape(m_pad, 1)
        out = pl.pallas_call(
            _embedding_onehot_kernel,
            out_shape=jax.ShapeDtypeStruct((m_pad, E), wte.dtype),
            grid_spec=pltpu.PrefetchScalarGridSpec(
                num_scalar_prefetch=0,
                grid=(n_tiles,),
                in_specs=[
                    pl.BlockSpec((tm_eff, 1), lambda i: (i, 0)),   # ids tile (VMEM)
                    pl.BlockSpec((V, E), lambda i: (0, 0)),        # whole table, resident
                ],
                out_specs=pl.BlockSpec((tm_eff, E), lambda i: (i, 0)),
            ),
            compiler_params=compiler_params,
            cost_estimate=pl.CostEstimate(
                flops=2 * m_pad * V * E,
                transcendentals=0,
                bytes_accessed=int(V * E * itemsize + 2 * m_pad * E * itemsize),
            ),
        )(ids_col, wte)
    else:
        # Large-vocab path: table stays in HBM, per-row DMA gather.
        kernel = functools.partial(
            _embedding_gather_kernel, tm=tm_eff, unroll=min(8, tm_eff)
        )
        out = pl.pallas_call(
            kernel,
            out_shape=jax.ShapeDtypeStruct((m_pad, E), wte.dtype),
            grid_spec=pltpu.PrefetchScalarGridSpec(
                num_scalar_prefetch=0,
                grid=(n_tiles,),
                in_specs=[
                    # ids streamed per tile into SMEM (O(tm) SMEM footprint).
                    pl.BlockSpec((tm_eff,), lambda i: (i,),
                                 memory_space=pltpu.MemorySpace.SMEM),
                    # embedding table stays in HBM; rows DMA'd on demand.
                    pl.BlockSpec(memory_space=pl.ANY),
                ],
                out_specs=pl.BlockSpec((tm_eff, E), lambda i: (i, 0)),
                scratch_shapes=[pltpu.SemaphoreType.DMA],   # one shared DMA sem
            ),
            compiler_params=compiler_params,
            cost_estimate=pl.CostEstimate(
                flops=0,
                transcendentals=0,
                bytes_accessed=int(m_pad * 4 + 2 * m_pad * E * itemsize),
            ),
        )(ids_flat, wte)

    if m_pad != M:
        out = out[:M]   # only when no clean divisor tile exists (rare)
    return out.reshape(lead, S, E)


def _ref_embedding(input_ids, wte):
    S = input_ids.shape[-1]
    return jnp.take(wte, input_ids.reshape(-1, S), axis=0)


if __name__ == "__main__":
    # Small config: vocab_size=512, n_embd=128, batch=2, seq=8.
    B, S = 2, 8
    V, E = 512, 128

    key = jax.random.PRNGKey(0)
    k_ids, k_wte = jax.random.split(key)
    input_ids = jax.random.randint(k_ids, (B, S), 0, V, dtype=jnp.int32)
    wte = jax.random.normal(k_wte, (V, E), dtype=jnp.float32) * 0.02

    ref = _ref_embedding(input_ids, wte)

    # 1) Auto path: 512x128 f32 table (256 KiB) takes the VMEM-resident
    #    one-hot/MXU fast path.  The MXU may run f32 through bf16 passes, so
    #    compare with a tolerance far below any wrong-row difference (~2e-2).
    out_fast = embedding_pallas(input_ids, wte)
    jax.block_until_ready(out_fast)
    assert out_fast.shape == (B, S, E), f"bad shape {out_fast.shape}"
    assert jnp.allclose(out_fast, ref, rtol=0.0, atol=1e-3), "fast-path mismatch"

    # 2) Forced large-vocab path: HBM row-DMA gather, bit-exact.
    out_gather = embedding_pallas(input_ids, wte, use_vmem_table=False)
    jax.block_until_ready(out_gather)
    assert out_gather.shape == (B, S, E), f"bad shape {out_gather.shape}"
    assert jnp.array_equal(out_gather, ref), "gather-path mismatch"

    print("KERNEL_OK")
</pallas_src>

<mosaic_0001>
module attributes {stable_mosaic.version = 11 : i64} {
  func.func @_embedding_onehot_kernel(%arg0: i32, %arg1: memref<16x1xi32, #tpu.memory_space<vmem>>, %arg2: memref<512x128xf32, #tpu.memory_space<vmem>>, %arg3: memref<16x128xf32, #tpu.memory_space<vmem>>) attributes {dimension_semantics = [#tpu.dimension_semantics<parallel>], iteration_bounds = array<i64: 1>, scalar_prefetch = 0 : i64, scratch_operands = 0 : i64, tpu.core_type = #tpu.core_type<tc>, window_params = [{transform_indices = @transform_0, window_bounds = array<i64: 16, 1>}, {pipeline_mode = #tpu.pipeline_mode<synchronous>, transform_indices = @transform_1, window_bounds = array<i64: 512, 128>}, {transform_indices = @transform_2, window_bounds = array<i64: 16, 128>}]} {
    %c0 = arith.constant 0 : index
    %c0_0 = arith.constant 0 : index
    %0 = vector.load %arg1[%c0, %c0_0] : memref<16x1xi32, #tpu.memory_space<vmem>>, vector<16x1xi32>
    %1 = tpu.iota {dimensions = array<i32: 1>} : vector<16x512xi32>
    %2 = vector.broadcast %0 : vector<16x1xi32> to vector<16x512xi32>
    %3 = arith.cmpi eq, %1, %2 : vector<16x512xi32>
    %4 = arith.extui %3 : vector<16x512xi1> to vector<16x512xi32>
    %5 = arith.sitofp %4 : vector<16x512xi32> to vector<16x512xf32>
    %c0_1 = arith.constant 0 : index
    %c0_2 = arith.constant 0 : index
    %6 = vector.load %arg2[%c0_1, %c0_2] : memref<512x128xf32, #tpu.memory_space<vmem>>, vector<512x128xf32>
    %cst = arith.constant dense<0.000000e+00> : vector<16x128xf32>
    %7 = tpu.matmul %5, %6, %cst {dimension_numbers = #tpu.dot_dimension_numbers<[1], [0], [0], [1], [0, 0, 1, 1], [], []>} : vector<16x512xf32>, vector<512x128xf32>, vector<16x128xf32> -> vector<16x128xf32>
    %c0_3 = arith.constant 0 : index
    %c0_4 = arith.constant 0 : index
    %8 = vector.load %arg3[%c0_3, %c0_4] : memref<16x128xf32, #tpu.memory_space<vmem>>, vector<16x128xf32>
    tpu.vector_store %arg3[%c0_3, %c0_4], %7 {strides = array<i32>} : memref<16x128xf32, #tpu.memory_space<vmem>>, vector<16x128xf32>,
    return
  }
  func.func @transform_0(%arg0: i32) -> (i32, i32) {
    %c0_i32 = arith.constant 0 : i32
    %c0_i32_0 = arith.constant 0 : i32
    return %arg0, %c0_i32 : i32, i32
  }
  func.func @transform_1(%arg0: i32) -> (i32, i32) {
    %c0_i32 = arith.constant 0 : i32
    %c0_i32_0 = arith.constant 0 : i32
    %c0_i32_1 = arith.constant 0 : i32
    return %c0_i32, %c0_i32_0 : i32, i32
  }
  func.func @transform_2(%arg0: i32) -> (i32, i32) {
    %c0_i32 = arith.constant 0 : i32
    %c0_i32_0 = arith.constant 0 : i32
    return %arg0, %c0_i32 : i32, i32
  }
}

</mosaic_0001>

<llo_original>
// kernel: embedding_pallas.1
$region0: #{embedding_pallas.1}
  #allocation0 [shape = 'u32[]', space=smem, size = 0x4, offset = 0x4, fixed_abs, tag = 'smem constant byte address 0x4 - core index']
  #allocation1 [shape = 'u32[144,128]{1,0:T(1,128)}', space=vmem, size = 0x12000, scoped, tag = 'internal scratch']
  %s0 = inlined_call_operand.vmem [shape: s32[16,1], index: 0, kind: input, shape index: {}]
  %s1 = inlined_call_operand.hbm [shape: f32[512,128], index: 1, kind: input, shape index: {}]
  %s2 = inlined_call_operand.hbm [shape: f32[16,128], index: 2, kind: output, shape index: {}]
  %s3 = sld [smem:[#allocation0]]
  $region22: #{embedding_pallas.1} parent=0
    _
  %s5 = ssub.s32 1, %s3
  %s6 = scalar_select 0, %s5, %s3
  $region1: #{embedding_pallas.1} parent=0
    #allocation2 [shape = 'u8[262144]{0}', space=vmem, size = 0x40000, scoped, tag = 'input window, operand 1, single buffered']
    #allocation3 [shape = 's32[1]{0}', space=sflag, size = 0x4, scoped, tag = 'scoped memory for embedding_pallas.1']
    #allocation4 [shape = 's32[1]{0}', space=sflag, size = 0x4, scoped, tag = 'scoped memory for embedding_pallas.1']
    #allocation5 [shape = 'u8[8192]{0}', space=vmem, size = 0x2000, scoped, tag = 'output window, operand 0, single buffered']
    %7 = vsyncpa [#allocation3], 0
    %8 = vsyncpa [#allocation4], 0
    // Predicated region
    $region2: #{embedding_pallas.1} parent=1 // pred_check
      _
    $region3: #{embedding_pallas.1} parent=1 // pred_check_branch
      %10 = sbr.rel (0) target = $region5
    $region4: #{embedding_pallas.1} parent=1 // pred_region
      _
    $region5: #{embedding_pallas.1} parent=1 // pred_fallthru
      _
    // Predicated region
    $region6: #{embedding_pallas.1} parent=1 // pred_check
      _
    $region7: #{embedding_pallas.1} parent=1 // pred_check_branch
      %12 = sbr.rel (0) target = $region9
    $region8: #{embedding_pallas.1} parent=1 // pred_region
      %s14 = ssub.s32 8192, 8192
      %15 = vsyncadd [#allocation3], %s14
      %s16 = sshll.u32 [#allocation2], 4
      %s17 = int_to_ptr.vmem [resolvable:$true] %s16
      %22 = dma.hbm_to_vmem [thread:$0]  %s1, 8192, %s17, [#allocation3], 128, 128, 8
    $region9: #{embedding_pallas.1} parent=1 // pred_fallthru
      _
    // Predicated region
    $region10: #{embedding_pallas.1} parent=1 // pred_check
      _
    $region11: #{embedding_pallas.1} parent=1 // pred_check_branch
      %24 = sbr.rel (0) target = $region13
    $region12: #{embedding_pallas.1} parent=1 // pred_region
      %25 = dma.done [#allocation3], 8192
    $region13: #{embedding_pallas.1} parent=1 // pred_fallthru
      _
    %v26 = vld [vmem:[%s0] sm:$0xff]
    %v27 = vld [vmem:[%s0 + $0x8] sm:$0xff]
    %v28 = vlaneseq
    %v29 = vand.u32 %v28, 127
    %v30 = vadd.s32 %v29, 128
    %v31 = vadd.s32 %v29, 256
    %v32 = vadd.s32 %v29, 384
    %33 = vset.pattern.permute.xlu0 0
    %34 = vperm.xlu0 %33, %v26
    %v35 = vpop.permute.xlu0 %34
    %36 = vset.pattern.permute.xlu0 0
    %37 = vperm.xlu0 %36, %v27
    %v38 = vpop.permute.xlu0 %37
    %vm39 = vcmp.eq.s32.totalorder %v29, %v35
    %vm40 = vcmp.eq.s32.totalorder %v30, %v35
    %vm41 = vcmp.eq.s32.totalorder %v31, %v35
    %vm42 = vcmp.eq.s32.totalorder %v32, %v35
    %vm43 = vcmp.eq.s32.totalorder %v29, %v38
    %vm44 = vcmp.eq.s32.totalorder %v30, %v38
    %vm45 = vcmp.eq.s32.totalorder %v31, %v38
    %vm46 = vcmp.eq.s32.totalorder %v32, %v38
    %v47 = vsel %vm39, 1, 0
    %v48 = vsel %vm40, 1, 0
    %v49 = vsel %vm41, 1, 0
    %v50 = vsel %vm42, 1, 0
    %v51 = vsel %vm43, 1, 0
    %v52 = vsel %vm44, 1, 0
    %v53 = vsel %vm45, 1, 0
    %v54 = vsel %vm46, 1, 0
    %v55 = vcvt.s32.f32 %v47
    %v56 = vcvt.s32.f32 %v48
    %v57 = vcvt.s32.f32 %v49
    %v58 = vcvt.s32.f32 %v50
    %v59 = vcvt.s32.f32 %v51
    %v60 = vcvt.s32.f32 %v52
    %v61 = vcvt.s32.f32 %v53
    %v62 = vcvt.s32.f32 %v54
    %v63 = vld [vmem:[#allocation2] sm:$0xff]
    %v64 = vld [vmem:[#allocation2 + $0x8] sm:$0xff]
    %v65 = vld [vmem:[#allocation2 + $0x10] sm:$0xff]
    %v66 = vld [vmem:[#allocation2 + $0x18] sm:$0xff]
    %v67 = vld [vmem:[#allocation2 + $0x20] sm:$0xff]
    %v68 = vld [vmem:[#allocation2 + $0x28] sm:$0xff]
    %v69 = vld [vmem:[#allocation2 + $0x30] sm:$0xff]
    %v70 = vld [vmem:[#allocation2 + $0x38] sm:$0xff]
    %v71 = vld [vmem:[#allocation2 + $0x40] sm:$0xff]
    %v72 = vld [vmem:[#allocation2 + $0x48] sm:$0xff]
    %v73 = vld [vmem:[#allocation2 + $0x50] sm:$0xff]
    %v74 = vld [vmem:[#allocation2 + $0x58] sm:$0xff]
    %v75 = vld [vmem:[#allocation2 + $0x60] sm:$0xff]
    %v76 = vld [vmem:[#allocation2 + $0x68] sm:$0xff]
    %v77 = vld [vmem:[#allocation2 + $0x70] sm:$0xff]
    %v78 = vld [vmem:[#allocation2 + $0x78] sm:$0xff]
    %v79 = vld [vmem:[#allocation2 + $0x80] sm:$0xff]
    %v80 = vld [vmem:[#allocation2 + $0x88] sm:$0xff]
    %v81 = vld [vmem:[#allocation2 + $0x90] sm:$0xff]
    %v82 = vld [vmem:[#allocation2 + $0x98] sm:$0xff]
    %v83 = vld [vmem:[#allocation2 + $0xa0] sm:$0xff]
    %v84 = vld [vmem:[#allocation2 + $0xa8] sm:$0xff]
    %v85 = vld [vmem:[#allocation2 + $0xb0] sm:$0xff]
    %v86 = vld [vmem:[#allocation2 + $0xb8] sm:$0xff]
    %v87 = vld [vmem:[#allocation2 + $0xc0] sm:$0xff]
    %v88 = vld [vmem:[#allocation2 + $0xc8] sm:$0xff]
    %v89 = vld [vmem:[#allocation2 + $0xd0] sm:$0xff]
    %v90 = vld [vmem:[#allocation2 + $0xd8] sm:$0xff]
    %v91 = vld [vmem:[#allocation2 + $0xe0] sm:$0xff]
    %v92 = vld [vmem:[#allocation2 + $0xe8] sm:$0xff]
    %v93 = vld [vmem:[#allocation2 + $0xf0] sm:$0xff]
    %v94 = vld [vmem:[#allocation2 + $0xf8] sm:$0xff]
    %v95 = vld [vmem:[#allocation2 + $0x100] sm:$0xff]
    %v96 = vld [vmem:[#allocation2 + $0x108] sm:$0xff]
    %v97 = vld [vmem:[#allocation2 + $0x110] sm:$0xff]
    %v98 = vld [vmem:[#allocation2 + $0x118] sm:$0xff]
    %v99 = vld [vmem:[#allocation2 + $0x120] sm:$0xff]
    %v100 = vld [vmem:[#allocation2 + $0x128] sm:$0xff]
    %v101 = vld [vmem:[#allocation2 + $0x130] sm:$0xff]
    %v102 = vld [vmem:[#allocation2 + $0x138] sm:$0xff]
    %v103 = vld [vmem:[#allocation2 + $0x140] sm:$0xff]
    %v104 = vld [vmem:[#allocation2 + $0x148] sm:$0xff]
    %v105 = vld [vmem:[#allocation2 + $0x150] sm:$0xff]
    %v106 = vld [vmem:[#allocation2 + $0x158] sm:$0xff]
    %v107 = vld [vmem:[#allocation2 + $0x160] sm:$0xff]
    %v108 = vld [vmem:[#allocation2 + $0x168] sm:$0xff]
    %v109 = vld [vmem:[#allocation2 + $0x170] sm:$0xff]
    %v110 = vld [vmem:[#allocation2 + $0x178] sm:$0xff]
    %v111 = vld [vmem:[#allocation2 + $0x180] sm:$0xff]
    %v112 = vld [vmem:[#allocation2 + $0x188] sm:$0xff]
    %v113 = vld [vmem:[#allocation2 + $0x190] sm:$0xff]
    %v114 = vld [vmem:[#allocation2 + $0x198] sm:$0xff]
    %v115 = vld [vmem:[#allocation2 + $0x1a0] sm:$0xff]
    %v116 = vld [vmem:[#allocation2 + $0x1a8] sm:$0xff]
    %v117 = vld [vmem:[#allocation2 + $0x1b0] sm:$0xff]
    %v118 = vld [vmem:[#allocation2 + $0x1b8] sm:$0xff]
    %v119 = vld [vmem:[#allocation2 + $0x1c0] sm:$0xff]
    %v120 = vld [vmem:[#allocation2 + $0x1c8] sm:$0xff]
    %v121 = vld [vmem:[#allocation2 + $0x1d0] sm:$0xff]
    %v122 = vld [vmem:[#allocation2 + $0x1d8] sm:$0xff]
    %v123 = vld [vmem:[#allocation2 + $0x1e0] sm:$0xff]
    %v124 = vld [vmem:[#allocation2 + $0x1e8] sm:$0xff]
    %v125 = vld [vmem:[#allocation2 + $0x1f0] sm:$0xff]
    %v126 = vld [vmem:[#allocation2 + $0x1f8] sm:$0xff]
    %127 = vmatprep.subr.mxu0 0.0
    %128 = vmatpush1.msra.mxu0 %v63
    %129 = vmatprep.subr.mxu0 0.0
    %130 = vmatpush1.msra.mxu0 %v64
    %131 = vmatprep.subr.mxu0 0.0
    %132 = vmatpush1.msra.mxu0 %v65
    %133 = vmatprep.subr.mxu0 0.0
    %134 = vmatpush1.msra.mxu0 %v66
    %135 = vmatprep.subr.mxu0 0.0
    %136 = vmatpush1.msra.mxu0 %v67
    %137 = vmatprep.subr.mxu0 0.0
    %138 = vmatpush1.msra.mxu0 %v68
    %139 = vmatprep.subr.mxu0 0.0
    %140 = vmatpush1.msra.mxu0 %v69
    %141 = vmatprep.subr.mxu0 0.0
    %142 = vmatpush1.msra.mxu0 %v70
    %143 = vmatprep.subr.mxu0 0.0
    %144 = vmatpush1.msra.mxu0 %v71
    %145 = vmatprep.subr.mxu0 0.0
    %146 = vmatpush1.msra.mxu0 %v72
    %147 = vmatprep.subr.mxu0 0.0
    %148 = vmatpush1.msra.mxu0 %v73
    %149 = vmatprep.subr.mxu0 0.0
    %150 = vmatpush1.msra.mxu0 %v74
    %151 = vmatprep.subr.mxu0 0.0
    %152 = vmatpush1.msra.mxu0 %v75
    %153 = vmatprep.subr.mxu0 0.0
    %154 = vmatpush1.msra.mxu0 %v76
    %155 = vmatprep.subr.mxu0 0.0
    %156 = vmatpush1.msra.mxu0 %v77
    %157 = vmatprep.subr.mxu0 0.0
    %158 = vmatpush1.msra.mxu0 %v78
    %159 = vmatprep.subr.mxu0 0.0
    %160 = vmatpush1.msra.mxu0 %v79
    %161 = vmatprep.subr.mxu0 0.0
    %162 = vmatpush1.msra.mxu0 %v80
    %163 = vmatprep.subr.mxu0 0.0
    %164 = vmatpush1.msra.mxu0 %v81
    %165 = vmatprep.subr.mxu0 0.0
    %166 = vmatpush1.msra.mxu0 %v82
    %167 = vmatprep.subr.mxu0 0.0
    %168 = vmatpush1.msra.mxu0 %v83
    %169 = vmatprep.subr.mxu0 0.0
    %170 = vmatpush1.msra.mxu0 %v84
    %171 = vmatprep.subr.mxu0 0.0
    %172 = vmatpush1.msra.mxu0 %v85
    %173 = vmatprep.subr.mxu0 0.0
    %174 = vmatpush1.msra.mxu0 %v86
    %175 = vmatprep.subr.mxu0 0.0
    %176 = vmatpush1.msra.mxu0 %v87
    %177 = vmatprep.subr.mxu0 0.0
    %178 = vmatpush1.msra.mxu0 %v88
    %179 = vmatprep.subr.mxu0 0.0
    %180 = vmatpush1.msra.mxu0 %v89
    %181 = vmatprep.subr.mxu0 0.0
    %182 = vmatpush1.msra.mxu0 %v90
    %183 = vmatprep.subr.mxu0 0.0
    %184 = vmatpush1.msra.mxu0 %v91
    %185 = vmatprep.subr.mxu0 0.0
    %186 = vmatpush1.msra.mxu0 %v92
    %187 = vmatprep.subr.mxu0 0.0
    %188 = vmatpush1.msra.mxu0 %v93
    %189 = vmatprep.subr.mxu0 0.0
    %190 = vmatpush1.msra.mxu0 %v94
    %191 = vmatprep.mubr.f32.mxu0 %v56
    %192 = vmatmul.mubr.f32.gmra.mrb[0].mxu0 %v55
    %v193 = vpop.f32.mrb[0].mxu0
    %v194 = vadd.f32 0.0, %v193
    %v195 = vpop.f32.mrb[0].mxu0
    %196 = vmatprep.mubr.f32.mxu0 %v60
    %197 = vmatmul.mubr.f32.gmra.mrb[0].mxu0 %v59
    %v198 = vpop.f32.mrb[0].mxu0
    %v199 = vadd.f32 0.0, %v198
    %v200 = vpop.f32.mrb[0].mxu0
    %201 = vdwg.mxu0
    %202 = vmatprep.subr.mxu0 0.0
    %203 = vmatpush1.msra.mxu0 %v95
    %204 = vmatprep.subr.mxu0 0.0
    %205 = vmatpush1.msra.mxu0 %v96
    %206 = vmatprep.subr.mxu0 0.0
    %207 = vmatpush1.msra.mxu0 %v97
    %208 = vmatprep.subr.mxu0 0.0
    %209 = vmatpush1.msra.mxu0 %v98
    %210 = vmatprep.subr.mxu0 0.0
    %211 = vmatpush1.msra.mxu0 %v99
    %212 = vmatprep.subr.mxu0 0.0
    %213 = vmatpush1.msra.mxu0 %v100
    %214 = vmatprep.subr.mxu0 0.0
    %215 = vmatpush1.msra.mxu0 %v101
    %216 = vmatprep.subr.mxu0 0.0
    %217 = vmatpush1.msra.mxu0 %v102
    %218 = vmatprep.subr.mxu0 0.0
    %219 = vmatpush1.msra.mxu0 %v103
    %220 = vmatprep.subr.mxu0 0.0
    %221 = vmatpush1.msra.mxu0 %v104
    %222 = vmatprep.subr.mxu0 0.0
    %223 = vmatpush1.msra.mxu0 %v105
    %224 = vmatprep.subr.mxu0 0.0
    %225 = vmatpush1.msra.mxu0 %v106
    %226 = vmatprep.subr.mxu0 0.0
    %227 = vmatpush1.msra.mxu0 %v107
    %228 = vmatprep.subr.mxu0 0.0
    %229 = vmatpush1.msra.mxu0 %v108
    %230 = vmatprep.subr.mxu0 0.0
    %231 = vmatpush1.msra.mxu0 %v109
    %232 = vmatprep.subr.mxu0 0.0
    %233 = vmatpush1.msra.mxu0 %v110
    %234 = vmatprep.subr.mxu0 0.0
    %235 = vmatpush1.msra.mxu0 %v111
    %236 = vmatprep.subr.mxu0 0.0
    %237 = vmatpush1.msra.mxu0 %v112
    %238 = vmatprep.subr.mxu0 0.0
    %239 = vmatpush1.msra.mxu0 %v113
    %240 = vmatprep.subr.mxu0 0.0
    %241 = vmatpush1.msra.mxu0 %v114
    %242 = vmatprep.subr.mxu0 0.0
    %243 = vmatpush1.msra.mxu0 %v115
    %244 = vmatprep.subr.mxu0 0.0
    %245 = vmatpush1.msra.mxu0 %v116
    %246 = vmatprep.subr.mxu0 0.0
    %247 = vmatpush1.msra.mxu0 %v117
    %248 = vmatprep.subr.mxu0 0.0
    %249 = vmatpush1.msra.mxu0 %v118
    %250 = vmatprep.subr.mxu0 0.0
    %251 = vmatpush1.msra.mxu0 %v119
    %252 = vmatprep.subr.mxu0 0.0
    %253 = vmatpush1.msra.mxu0 %v120
    %254 = vmatprep.subr.mxu0 0.0
    %255 = vmatpush1.msra.mxu0 %v121
    %256 = vmatprep.subr.mxu0 0.0
    %257 = vmatpush1.msra.mxu0 %v122
    %258 = vmatprep.subr.mxu0 0.0
    %259 = vmatpush1.msra.mxu0 %v123
    %260 = vmatprep.subr.mxu0 0.0
    %261 = vmatpush1.msra.mxu0 %v124
    %262 = vmatprep.subr.mxu0 0.0
    %263 = vmatpush1.msra.mxu0 %v125
    %264 = vmatprep.subr.mxu0 0.0
    %265 = vmatpush1.msra.mxu0 %v126
    %266 = vmatprep.mubr.f32.mxu0 %v58
    %267 = vmatmul.mubr.f32.gmra.mrb[0].mxu0 %v57
    %v268 = vpop.f32.mrb[0].mxu0
    %v269 = vadd.f32 %v194, %v268
    %v270 = vpop.f32.mrb[0].mxu0
    %271 = vmatprep.mubr.f32.mxu0 %v62
    %272 = vmatmul.mubr.f32.gmra.mrb[0].mxu0 %v61
    %v273 = vpop.f32.mrb[0].mxu0
    %v274 = vadd.f32 %v199, %v273
    %v275 = vpop.f32.mrb[0].mxu0
    %276 = vdwg.mxu0
    %277 = vst [vmem:[#allocation5] sm:$0xff] %v269
    %278 = vst [vmem:[#allocation5 + $0x8] sm:$0xff] %v274
    // Predicated region
    $region14: #{embedding_pallas.1} parent=1 // pred_check
      _
    $region15: #{embedding_pallas.1} parent=1 // pred_check_branch
      %280 = sbr.rel (0) target = $region17
    $region16: #{embedding_pallas.1} parent=1 // pred_region
      %s282 = ssub.s32 256, 256
      %283 = vsyncadd [#allocation4], %s282
      %s284 = sshll.u32 [#allocation5], 4
      %s285 = int_to_ptr.vmem [resolvable:$true] %s284
      %290 = dma.vmem_to_hbm [thread:$0]  %s285, 256, %s2, [#allocation4], 128, 128, 8
    $region17: #{embedding_pallas.1} parent=1 // pred_fallthru
      _
    // Predicated region
    $region18: #{embedding_pallas.1} parent=1 // pred_check
      _
    $region19: #{embedding_pallas.1} parent=1 // pred_check_branch
      %292 = sbr.rel (0) target = $region21
    $region20: #{embedding_pallas.1} parent=1 // pred_region
      %293 = dma.done [#allocation4], 256
    $region21: #{embedding_pallas.1} parent=1 // pred_fallthru
      _
    %294 = vsyncpa [#allocation3], 1
    %295 = vsyncpa [#allocation4], 1

</llo_original>
